<compile_context>
chip_gen: v6e
topology: v6e:2x2x1
jax: 0.10.0
libtpu: 0.0.40
codegen_flags: <defaults>
</compile_context>

<pallas_src>
import functools

import jax
import jax.numpy as jnp
from jax.experimental import pallas as pl
from jax.experimental.pallas import tpu as pltpu

_MIB = 1024 * 1024


def _tpu_params():
    """Best-effort query of (physical VMEM bytes, TensorCores per device)."""
    vmem_bytes = 128 * _MIB   # v5e/v6e default
    num_cores = 1
    try:
        info = pltpu.get_tpu_info()
        v = getattr(info, "vmem_capacity_bytes", None)
        if v:
            vmem_bytes = int(v)
        for name in ("num_cores", "num_cores_per_chip", "core_count",
                     "tensorcore_count", "num_tensorcores"):
            c = getattr(info, name, None)
            if c:
                num_cores = int(c)
                break
    except Exception:
        pass
    return vmem_bytes, num_cores


def _choose_tile_b(batch, feat, itemsize, target_bytes):
    """Pick a batch tile ~target_bytes per (double-buffered) input buffer,
    rounded to the dtype's native sublane packing."""
    packing = max(8, 8 * (4 // max(1, itemsize)))  # f32:8, bf16:16, int8:32
    per_row = max(1, feat * itemsize)
    tile = int(target_bytes // per_row)
    if tile >= batch:
        # Whole batch in one block (block dim == full array dim is always legal).
        return batch
    return max(packing, (tile // packing) * packing)


def _triplet_kernel(a_ref, p_ref, n_ref, loss_ref, pd_ref, nd_ref, *,
                    margin, distance_metric, batch_size, tile_b,
                    tiles_per_split, needs_mask):
    c = pl.program_id(0)   # core-split index
    i = pl.program_id(1)   # batch-tile reduction index (within the split)

    # Output blocks are resident across the reduction axis (constant block
    # index along axis 1) -> use them as accumulators.  Zero them on the first
    # reduction step of each split.
    @pl.when(i == 0)
    def _():
        loss_ref[...] = jnp.zeros_like(loss_ref)
        pd_ref[...] = jnp.zeros_like(pd_ref)
        nd_ref[...] = jnp.zeros_like(nd_ref)

    a = a_ref[...].astype(jnp.float32)

    if distance_metric == "euclidean":
        # Matches torch.nn.functional.pairwise_distance(p=2, eps=1e-6):
        # dist = || x1 - x2 + eps ||_2.  Upcast per pair so the cast fuses
        # into the subtract (no 3 up-front f32 tile materializations).
        eps = jnp.float32(1e-6)
        d = a - p_ref[...].astype(jnp.float32) + eps
        pos_dist = jnp.sqrt(jnp.sum(d * d, axis=-1, keepdims=True))  # [T,1]
        d = a - n_ref[...].astype(jnp.float32) + eps
        neg_dist = jnp.sqrt(jnp.sum(d * d, axis=-1, keepdims=True))  # [T,1]
    elif distance_metric == "cosine":
        # Matches torch.nn.functional.cosine_similarity(eps=1e-8):
        # sim = (x1 . x2) / max(||x1|| * ||x2||, eps)
        eps = jnp.float32(1e-8)
        a_norm = jnp.sqrt(jnp.sum(a * a, axis=-1, keepdims=True))
        p = p_ref[...].astype(jnp.float32)
        pos_sim = jnp.sum(a * p, axis=-1, keepdims=True) / jnp.maximum(
            a_norm * jnp.sqrt(jnp.sum(p * p, axis=-1, keepdims=True)), eps)
        n = n_ref[...].astype(jnp.float32)
        neg_sim = jnp.sum(a * n, axis=-1, keepdims=True) / jnp.maximum(
            a_norm * jnp.sqrt(jnp.sum(n * n, axis=-1, keepdims=True)), eps)
        pos_dist = 1.0 - pos_sim
        neg_dist = 1.0 - neg_sim
    else:
        raise ValueError(f"Unknown distance metric: {distance_metric}")

    loss = jnp.maximum(pos_dist - neg_dist + jnp.float32(margin), 0.0)

    if needs_mask:
        # Only emitted when padded rows can exist (partial last tile, or a
        # clamped duplicate tile on a split that has run out of work).
        tile_idx = c * tiles_per_split + i
        row = jax.lax.broadcasted_iota(jnp.int32, (tile_b, 1), 0)
        valid = (tile_idx * tile_b + row) < batch_size
        zero = jnp.float32(0.0)
        loss = jnp.where(valid, loss, zero)
        pos_dist = jnp.where(valid, pos_dist, zero)
        neg_dist = jnp.where(valid, neg_dist, zero)

    loss_ref[...] += jnp.sum(loss, keepdims=True)
    pd_ref[...] += jnp.sum(pos_dist, keepdims=True)
    nd_ref[...] += jnp.sum(neg_dist, keepdims=True)


def triplet_loss(anchor, positive, negative, *, margin=0.5,
                 distance_metric="euclidean", max_tile_rows=None):
    """Pallas TPU implementation of TripletLoss.forward.

    anchor/positive/negative: [batch, feature_dim] arrays (any float dtype).
    Returns (loss_mean, pos_dist_mean, neg_dist_mean) as scalar float32 arrays.
    `max_tile_rows` (multiple of 8) optionally caps the batch tile for testing.
    """
    assert anchor.shape == positive.shape == negative.shape
    assert anchor.ndim == 2
    B, D = anchor.shape

    phys_vmem, num_cores = _tpu_params()
    # Scoped-VMEM budget: half of physical VMEM (64 MiB on 128-MiB v5e/v6e,
    # 32 MiB on v7x's 64 MiB), leaving the rest for internal scratch.
    vmem_limit = max(16 * _MIB, phys_vmem // 2)
    # 3 inputs x 2 pipeline buffers must fit inside the limit with headroom.
    target_bytes = max(_MIB, (vmem_limit - 2 * _MIB) // (3 * 2))

    itemsize = jnp.dtype(anchor.dtype).itemsize
    tile_b = _choose_tile_b(B, D, itemsize, target_bytes)
    if max_tile_rows is not None:
        tile_b = min(tile_b, max_tile_rows)
    num_tiles = pl.cdiv(B, tile_b)

    # Only split across TensorCores when the device actually has more than one.
    n_split = max(1, min(num_cores, num_tiles))
    tiles_per_split = pl.cdiv(num_tiles, n_split)

    # Make sure the limit always covers the pipelined input buffers.
    block_bytes = tile_b * D * itemsize
    vmem_limit = min(phys_vmem, max(vmem_limit, 6 * block_bytes + 2 * _MIB))

    needs_mask = (B % tile_b != 0) or (n_split * tiles_per_split != num_tiles)

    def in_map(c, i):
        t = c * tiles_per_split + i
        if needs_mask:
            # Clamp so empty tiles of a trailing split never DMA out of bounds;
            # their rows are masked to zero inside the kernel anyway.
            t = jnp.minimum(t, num_tiles - 1)
        return (t, 0)

    in_spec = pl.BlockSpec((tile_b, D), in_map)
    # One (1,1) f32 partial-sum block per split; leading split dim squeezed.
    out_spec = pl.BlockSpec((None, 1, 1), lambda c, i: (c, 0, 0))
    out_shape = jax.ShapeDtypeStruct((n_split, 1, 1), jnp.float32)

    core_sem = (getattr(pltpu, "CORE_PARALLEL", "parallel")
                if n_split > 1 else "arbitrary")

    kernel = functools.partial(
        _triplet_kernel,
        margin=float(margin),
        distance_metric=distance_metric,
        batch_size=B,
        tile_b=tile_b,
        tiles_per_split=tiles_per_split,
        needs_mask=needs_mask,
    )

    loss_p, pd_p, nd_p = pl.pallas_call(
        kernel,
        out_shape=(out_shape, out_shape, out_shape),
        grid_spec=pltpu.PrefetchScalarGridSpec(
            num_scalar_prefetch=0,
            grid=(n_split, tiles_per_split),
            in_specs=[in_spec, in_spec, in_spec],
            out_specs=(out_spec, out_spec, out_spec),
        ),
        compiler_params=pltpu.CompilerParams(
            dimension_semantics=(core_sem, "arbitrary"),
            vmem_limit_bytes=int(vmem_limit),
        ),
    )(anchor, positive, negative)

    inv_b = jnp.float32(1.0 / B)
    return (jnp.sum(loss_p) * inv_b,
            jnp.sum(pd_p) * inv_b,
            jnp.sum(nd_p) * inv_b)


def _reference(anchor, positive, negative, *, margin=0.5,
               distance_metric="euclidean"):
    a = anchor.astype(jnp.float32)
    p = positive.astype(jnp.float32)
    n = negative.astype(jnp.float32)
    if distance_metric == "euclidean":
        pos_dist = jnp.sqrt(jnp.sum((a - p + 1e-6) ** 2, axis=-1))
        neg_dist = jnp.sqrt(jnp.sum((a - n + 1e-6) ** 2, axis=-1))
    else:
        def cos(x, y):
            nx = jnp.sqrt(jnp.sum(x * x, -1))
            ny = jnp.sqrt(jnp.sum(y * y, -1))
            return jnp.sum(x * y, -1) / jnp.maximum(nx * ny, 1e-8)
        pos_dist = 1.0 - cos(a, p)
        neg_dist = 1.0 - cos(a, n)
    loss = jnp.maximum(pos_dist - neg_dist + margin, 0.0)
    return loss.mean(), pos_dist.mean(), neg_dist.mean()


if __name__ == "__main__":
    key = jax.random.PRNGKey(0)
    k1, k2, k3 = jax.random.split(key, 3)
    B, D = 8, 32
    anchor = jax.random.normal(k1, (B, D), dtype=jnp.float32)
    positive = jax.random.normal(k2, (B, D), dtype=jnp.float32)
    negative = jax.random.normal(k3, (B, D), dtype=jnp.float32)

    # euclidean (module default)
    loss, pos_d, neg_d = triplet_loss(
        anchor, positive, negative, margin=0.5, distance_metric="euclidean")
    jax.block_until_ready((loss, pos_d, neg_d))
    ref = _reference(anchor, positive, negative, margin=0.5,
                     distance_metric="euclidean")
    assert jnp.allclose(loss, ref[0], atol=1e-5)
    assert jnp.allclose(pos_d, ref[1], atol=1e-5)
    assert jnp.allclose(neg_d, ref[2], atol=1e-5)

    # cosine variant
    loss_c, pos_c, neg_c = triplet_loss(
        anchor, positive, negative, margin=0.5, distance_metric="cosine")
    jax.block_until_ready((loss_c, pos_c, neg_c))
    ref_c = _reference(anchor, positive, negative, margin=0.5,
                       distance_metric="cosine")
    assert jnp.allclose(loss_c, ref_c[0], atol=1e-5)
    assert jnp.allclose(pos_c, ref_c[1], atol=1e-5)
    assert jnp.allclose(neg_c, ref_c[2], atol=1e-5)

    # uneven batch + forced small tile (exercises multi-tile accumulation and
    # the partial-tile masking path)
    B2 = 37
    a2 = jax.random.normal(k1, (B2, D), dtype=jnp.float32)
    p2 = jax.random.normal(k2, (B2, D), dtype=jnp.float32)
    n2 = jax.random.normal(k3, (B2, D), dtype=jnp.float32)
    out2 = triplet_loss(a2, p2, n2, margin=0.5, distance_metric="euclidean",
                        max_tile_rows=16)
    jax.block_until_ready(out2)
    ref2 = _reference(a2, p2, n2, margin=0.5, distance_metric="euclidean")
    assert jnp.allclose(out2[0], ref2[0], atol=1e-5)
    assert jnp.allclose(out2[1], ref2[1], atol=1e-5)
    assert jnp.allclose(out2[2], ref2[2], atol=1e-5)

    # bf16 inputs (native-dtype DMA, in-kernel upcast)
    a3 = anchor.astype(jnp.bfloat16)
    p3 = positive.astype(jnp.bfloat16)
    n3 = negative.astype(jnp.bfloat16)
    out3 = triplet_loss(a3, p3, n3, margin=0.5, distance_metric="euclidean")
    jax.block_until_ready(out3)
    ref3 = _reference(a3, p3, n3, margin=0.5, distance_metric="euclidean")
    assert jnp.allclose(out3[0], ref3[0], atol=1e-3)
    assert jnp.allclose(out3[1], ref3[1], atol=1e-3)
    assert jnp.allclose(out3[2], ref3[2], atol=1e-3)

    print("KERNEL_OK")
</pallas_src>

<mosaic_0001>
module attributes {stable_mosaic.version = 11 : i64} {
  func.func @_triplet_kernel(%arg0: i32, %arg1: i32, %arg2: memref<8x32xf32, #tpu.memory_space<vmem>>, %arg3: memref<8x32xf32, #tpu.memory_space<vmem>>, %arg4: memref<8x32xf32, #tpu.memory_space<vmem>>, %arg5: memref<1x1x1xf32, #tpu.memory_space<vmem>>, %arg6: memref<1x1x1xf32, #tpu.memory_space<vmem>>, %arg7: memref<1x1x1xf32, #tpu.memory_space<vmem>>) attributes {dimension_semantics = [#tpu.dimension_semantics<arbitrary>, #tpu.dimension_semantics<arbitrary>], iteration_bounds = array<i64: 1, 1>, scalar_prefetch = 0 : i64, scratch_operands = 0 : i64, tpu.core_type = #tpu.core_type<tc>, window_params = [{transform_indices = @transform_0, window_bounds = array<i64: 8, 32>}, {transform_indices = @transform_1, window_bounds = array<i64: 8, 32>}, {transform_indices = @transform_2, window_bounds = array<i64: 8, 32>}, {transform_indices = @transform_3, window_bounds = array<i64: 1, 1, 1>}, {transform_indices = @transform_4, window_bounds = array<i64: 1, 1, 1>}, {transform_indices = @transform_5, window_bounds = array<i64: 1, 1, 1>}]} {
    %c0_i32 = arith.constant 0 : i32
    %0 = arith.cmpi eq, %arg1, %c0_i32 : i32
    %1 = arith.extui %0 : i1 to i32
    %c0_i32_0 = arith.constant 0 : i32
    %2 = arith.cmpi ne, %1, %c0_i32_0 : i32
    scf.if %2 {
      %cst_32 = arith.constant 0.000000e+00 : f32
      %58 = vector.broadcast %cst_32 : f32 to vector<1x1xf32>
      %c0_33 = arith.constant 0 : index
      %c0_34 = arith.constant 0 : index
      %c0_35 = arith.constant 0 : index
      %59 = vector.load %arg5[%c0_33, %c0_34, %c0_35] : memref<1x1x1xf32, #tpu.memory_space<vmem>>, vector<1x1x1xf32>
      %60 = vector.shape_cast %59 : vector<1x1x1xf32> to vector<1x1xf32>
      %61 = vector.shape_cast %58 : vector<1x1xf32> to vector<1x1x1xf32>
      tpu.vector_store %arg5[%c0_33, %c0_34, %c0_35], %61 {strides = array<i32>} : memref<1x1x1xf32, #tpu.memory_space<vmem>>, vector<1x1x1xf32>,
      %cst_36 = arith.constant 0.000000e+00 : f32
      %62 = vector.broadcast %cst_36 : f32 to vector<1x1xf32>
      %c0_37 = arith.constant 0 : index
      %c0_38 = arith.constant 0 : index
      %c0_39 = arith.constant 0 : index
      %63 = vector.load %arg6[%c0_37, %c0_38, %c0_39] : memref<1x1x1xf32, #tpu.memory_space<vmem>>, vector<1x1x1xf32>
      %64 = vector.shape_cast %63 : vector<1x1x1xf32> to vector<1x1xf32>
      %65 = vector.shape_cast %62 : vector<1x1xf32> to vector<1x1x1xf32>
      tpu.vector_store %arg6[%c0_37, %c0_38, %c0_39], %65 {strides = array<i32>} : memref<1x1x1xf32, #tpu.memory_space<vmem>>, vector<1x1x1xf32>,
      %cst_40 = arith.constant 0.000000e+00 : f32
      %66 = vector.broadcast %cst_40 : f32 to vector<1x1xf32>
      %c0_41 = arith.constant 0 : index
      %c0_42 = arith.constant 0 : index
      %c0_43 = arith.constant 0 : index
      %67 = vector.load %arg7[%c0_41, %c0_42, %c0_43] : memref<1x1x1xf32, #tpu.memory_space<vmem>>, vector<1x1x1xf32>
      %68 = vector.shape_cast %67 : vector<1x1x1xf32> to vector<1x1xf32>
      %69 = vector.shape_cast %66 : vector<1x1xf32> to vector<1x1x1xf32>
      tpu.vector_store %arg7[%c0_41, %c0_42, %c0_43], %69 {strides = array<i32>} : memref<1x1x1xf32, #tpu.memory_space<vmem>>, vector<1x1x1xf32>,
    } else {
    }
    %c0 = arith.constant 0 : index
    %c0_1 = arith.constant 0 : index
    %3 = vector.load %arg2[%c0, %c0_1] : memref<8x32xf32, #tpu.memory_space<vmem>>, vector<8x32xf32>
    %c0_2 = arith.constant 0 : index
    %c0_3 = arith.constant 0 : index
    %4 = vector.load %arg3[%c0_2, %c0_3] : memref<8x32xf32, #tpu.memory_space<vmem>>, vector<8x32xf32>
    %5 = arith.subf %3, %4 : vector<8x32xf32>
    %cst = arith.constant 9.99999997E-7 : f32
    %6 = vector.broadcast %cst : f32 to vector<8x32xf32>
    %7 = arith.addf %5, %6 : vector<8x32xf32>
    %8 = arith.mulf %7, %7 : vector<8x32xf32>
    %cst_4 = arith.constant dense<0.000000e+00> : vector<8xf32>
    %9 = vector.multi_reduction <add>, %8, %cst_4 [1] : vector<8x32xf32> to vector<8xf32>
    %10 = vector.shape_cast %9 : vector<8xf32> to vector<8x1xf32>
    %11 = math.sqrt %10 : vector<8x1xf32>
    %c0_5 = arith.constant 0 : index
    %c0_6 = arith.constant 0 : index
    %12 = vector.load %arg4[%c0_5, %c0_6] : memref<8x32xf32, #tpu.memory_space<vmem>>, vector<8x32xf32>
    %13 = arith.subf %3, %12 : vector<8x32xf32>
    %cst_7 = arith.constant 9.99999997E-7 : f32
    %14 = vector.broadcast %cst_7 : f32 to vector<8x32xf32>
    %15 = arith.addf %13, %14 : vector<8x32xf32>
    %16 = arith.mulf %15, %15 : vector<8x32xf32>
    %cst_8 = arith.constant dense<0.000000e+00> : vector<8xf32>
    %17 = vector.multi_reduction <add>, %16, %cst_8 [1] : vector<8x32xf32> to vector<8xf32>
    %18 = vector.shape_cast %17 : vector<8xf32> to vector<8x1xf32>
    %19 = math.sqrt %18 : vector<8x1xf32>
    %20 = arith.subf %11, %19 : vector<8x1xf32>
    %cst_9 = arith.constant 5.000000e-01 : f32
    %21 = vector.broadcast %cst_9 : f32 to vector<8x1xf32>
    %22 = arith.addf %20, %21 : vector<8x1xf32>
    %cst_10 = arith.constant 0.000000e+00 : f32
    %23 = vector.broadcast %cst_10 : f32 to vector<8x1xf32>
    %24 = arith.maximumf %22, %23 : vector<8x1xf32>
    %c0_11 = arith.constant 0 : index
    %c0_12 = arith.constant 0 : index
    %c0_13 = arith.constant 0 : index
    %25 = vector.load %arg5[%c0_11, %c0_12, %c0_13] : memref<1x1x1xf32, #tpu.memory_space<vmem>>, vector<1x1x1xf32>
    %26 = vector.shape_cast %25 : vector<1x1x1xf32> to vector<1x1xf32>
    %27 = vector.shape_cast %24 : vector<8x1xf32> to vector<1x8x1xf32>
    %cst_14 = arith.constant dense<0.000000e+00> : vector<1xf32>
    %28 = vector.multi_reduction <add>, %27, %cst_14 [1, 2] : vector<1x8x1xf32> to vector<1xf32>
    %29 = vector.shape_cast %28 : vector<1xf32> to vector<1x1x1xf32>
    %30 = vector.extract %29[0, 0, 0] : f32 from vector<1x1x1xf32>
    %31 = vector.broadcast %30 : f32 to vector<1x1xf32>
    %32 = arith.addf %26, %31 : vector<1x1xf32>
    %c0_15 = arith.constant 0 : index
    %c0_16 = arith.constant 0 : index
    %c0_17 = arith.constant 0 : index
    %33 = vector.load %arg5[%c0_15, %c0_16, %c0_17] : memref<1x1x1xf32, #tpu.memory_space<vmem>>, vector<1x1x1xf32>
    %34 = vector.shape_cast %33 : vector<1x1x1xf32> to vector<1x1xf32>
    %35 = vector.shape_cast %32 : vector<1x1xf32> to vector<1x1x1xf32>
    tpu.vector_store %arg5[%c0_15, %c0_16, %c0_17], %35 {strides = array<i32>} : memref<1x1x1xf32, #tpu.memory_space<vmem>>, vector<1x1x1xf32>,
    %c0_18 = arith.constant 0 : index
    %c0_19 = arith.constant 0 : index
    %c0_20 = arith.constant 0 : index
    %36 = vector.load %arg6[%c0_18, %c0_19, %c0_20] : memref<1x1x1xf32, #tpu.memory_space<vmem>>, vector<1x1x1xf32>
    %37 = vector.shape_cast %36 : vector<1x1x1xf32> to vector<1x1xf32>
    %38 = vector.shape_cast %11 : vector<8x1xf32> to vector<1x8x1xf32>
    %cst_21 = arith.constant dense<0.000000e+00> : vector<1xf32>
    %39 = vector.multi_reduction <add>, %38, %cst_21 [1, 2] : vector<1x8x1xf32> to vector<1xf32>
    %40 = vector.shape_cast %39 : vector<1xf32> to vector<1x1x1xf32>
    %41 = vector.extract %40[0, 0, 0] : f32 from vector<1x1x1xf32>
    %42 = vector.broadcast %41 : f32 to vector<1x1xf32>
    %43 = arith.addf %37, %42 : vector<1x1xf32>
    %c0_22 = arith.constant 0 : index
    %c0_23 = arith.constant 0 : index
    %c0_24 = arith.constant 0 : index
    %44 = vector.load %arg6[%c0_22, %c0_23, %c0_24] : memref<1x1x1xf32, #tpu.memory_space<vmem>>, vector<1x1x1xf32>
    %45 = vector.shape_cast %44 : vector<1x1x1xf32> to vector<1x1xf32>
    %46 = vector.shape_cast %43 : vector<1x1xf32> to vector<1x1x1xf32>
    tpu.vector_store %arg6[%c0_22, %c0_23, %c0_24], %46 {strides = array<i32>} : memref<1x1x1xf32, #tpu.memory_space<vmem>>, vector<1x1x1xf32>,
    %c0_25 = arith.constant 0 : index
    %c0_26 = arith.constant 0 : index
    %c0_27 = arith.constant 0 : index
    %47 = vector.load %arg7[%c0_25, %c0_26, %c0_27] : memref<1x1x1xf32, #tpu.memory_space<vmem>>, vector<1x1x1xf32>
    %48 = vector.shape_cast %47 : vector<1x1x1xf32> to vector<1x1xf32>
    %49 = vector.shape_cast %19 : vector<8x1xf32> to vector<1x8x1xf32>
    %cst_28 = arith.constant dense<0.000000e+00> : vector<1xf32>
    %50 = vector.multi_reduction <add>, %49, %cst_28 [1, 2] : vector<1x8x1xf32> to vector<1xf32>
    %51 = vector.shape_cast %50 : vector<1xf32> to vector<1x1x1xf32>
    %52 = vector.extract %51[0, 0, 0] : f32 from vector<1x1x1xf32>
    %53 = vector.broadcast %52 : f32 to vector<1x1xf32>
    %54 = arith.addf %48, %53 : vector<1x1xf32>
    %c0_29 = arith.constant 0 : index
    %c0_30 = arith.constant 0 : index
    %c0_31 = arith.constant 0 : index
    %55 = vector.load %arg7[%c0_29, %c0_30, %c0_31] : memref<1x1x1xf32, #tpu.memory_space<vmem>>, vector<1x1x1xf32>
    %56 = vector.shape_cast %55 : vector<1x1x1xf32> to vector<1x1xf32>
    %57 = vector.shape_cast %54 : vector<1x1xf32> to vector<1x1x1xf32>
    tpu.vector_store %arg7[%c0_29, %c0_30, %c0_31], %57 {strides = array<i32>} : memref<1x1x1xf32, #tpu.memory_space<vmem>>, vector<1x1x1xf32>,
    return
  }
  func.func @transform_0(%arg0: i32, %arg1: i32) -> (i32, i32) {
    %c1_i32 = arith.constant 1 : i32
    %0 = arith.muli %arg0, %c1_i32 : i32
    %1 = arith.addi %0, %arg1 : i32
    %c0_i32 = arith.constant 0 : i32
    %c0_i32_0 = arith.constant 0 : i32
    return %1, %c0_i32 : i32, i32
  }
  func.func @transform_1(%arg0: i32, %arg1: i32) -> (i32, i32) {
    %c1_i32 = arith.constant 1 : i32
    %0 = arith.muli %arg0, %c1_i32 : i32
    %1 = arith.addi %0, %arg1 : i32
    %c0_i32 = arith.constant 0 : i32
    %c0_i32_0 = arith.constant 0 : i32
    return %1, %c0_i32 : i32, i32
  }
  func.func @transform_2(%arg0: i32, %arg1: i32) -> (i32, i32) {
    %c1_i32 = arith.constant 1 : i32
    %0 = arith.muli %arg0, %c1_i32 : i32
    %1 = arith.addi %0, %arg1 : i32
    %c0_i32 = arith.constant 0 : i32
    %c0_i32_0 = arith.constant 0 : i32
    return %1, %c0_i32 : i32, i32
  }
  func.func @transform_3(%arg0: i32, %arg1: i32) -> (i32, i32, i32) {
    %c0_i32 = arith.constant 0 : i32
    %c0_i32_0 = arith.constant 0 : i32
    %c0_i32_1 = arith.constant 0 : i32
    return %arg0, %c0_i32, %c0_i32_0 : i32, i32, i32
  }
  func.func @transform_4(%arg0: i32, %arg1: i32) -> (i32, i32, i32) {
    %c0_i32 = arith.constant 0 : i32
    %c0_i32_0 = arith.constant 0 : i32
    %c0_i32_1 = arith.constant 0 : i32
    return %arg0, %c0_i32, %c0_i32_0 : i32, i32, i32
  }
  func.func @transform_5(%arg0: i32, %arg1: i32) -> (i32, i32, i32) {
    %c0_i32 = arith.constant 0 : i32
    %c0_i32_0 = arith.constant 0 : i32
    %c0_i32_1 = arith.constant 0 : i32
    return %arg0, %c0_i32, %c0_i32_0 : i32, i32, i32
  }
}

</mosaic_0001>

<llo_original>
// kernel: tpu_custom_call.1
$region0: #{tpu_custom_call.1}
  #allocation0 [shape = 'u32[]', space=smem, size = 0x4, offset = 0x4, fixed_abs, tag = 'smem constant byte address 0x4 - core index']
  #allocation1 [shape = 'u32[144,128]{1,0:T(1,128)}', space=vmem, size = 0x12000, scoped, tag = 'internal scratch']
  %s0 = inlined_call_operand.hbm [shape: f32[8,32], index: 0, kind: input, shape index: {}]
  %s1 = inlined_call_operand.hbm [shape: f32[8,32], index: 1, kind: input, shape index: {}]
  %s2 = inlined_call_operand.hbm [shape: f32[8,32], index: 2, kind: input, shape index: {}]
  %s3 = inlined_call_operand.hbm [shape: f32[1,1,1], index: 3, kind: output, shape index: {0}]
  %s4 = inlined_call_operand.hbm [shape: f32[1,1,1], index: 4, kind: output, shape index: {1}]
  %s5 = inlined_call_operand.hbm [shape: f32[1,1,1], index: 5, kind: output, shape index: {2}]
  %6 = xla_tuple %s3, %s4, %s5
  %s7 = sld [smem:[#allocation0]]
  $region54: #{tpu_custom_call.1} parent=0
    _
  %s9 = ssub.s32 1, %s7
  %s10 = scalar_select 0, %s9, %s7
  $region1: #{tpu_custom_call.1} parent=0
    #allocation2 [shape = 'u8[4096]{0}', space=vmem, size = 0x1000, scoped, tag = 'input window, operand 0, single buffered']
    #allocation3 [shape = 's32[1]{0}', space=sflag, size = 0x4, scoped, tag = 'scoped memory for tpu_custom_call.1']
    #allocation4 [shape = 's32[1]{0}', space=sflag, size = 0x4, scoped, tag = 'scoped memory for tpu_custom_call.1']
    #allocation5 [shape = 'u8[4096]{0}', space=vmem, size = 0x1000, scoped, tag = 'input window, operand 1, single buffered']
    #allocation6 [shape = 's32[1]{0}', space=sflag, size = 0x4, scoped, tag = 'scoped memory for tpu_custom_call.1']
    #allocation7 [shape = 'u8[4096]{0}', space=vmem, size = 0x1000, scoped, tag = 'input window, operand 2, single buffered']
    #allocation8 [shape = 'u8[512]{0}', space=vmem, size = 0x400, scoped, tag = 'output window, operand 0, single buffered']
    #allocation9 [shape = 'u8[512]{0}', space=vmem, size = 0x400, scoped, tag = 'output window, operand 1, single buffered']
    #allocation10 [shape = 's32[1]{0}', space=sflag, size = 0x4, scoped, tag = 'scoped memory for tpu_custom_call.1']
    #allocation11 [shape = 'u8[512]{0}', space=vmem, size = 0x400, scoped, tag = 'output window, operand 2, single buffered']
    %11 = vsyncpa [#allocation3], 0
    %12 = vsyncpa [#allocation6], 0
    %13 = vsyncpa [#allocation4], 0
    %14 = vsyncpa [#allocation10], 0
    // Predicated region
    $region2: #{tpu_custom_call.1} parent=1 // pred_check
      _
    $region3: #{tpu_custom_call.1} parent=1 // pred_check_branch
      %16 = sbr.rel (0) target = $region5
    $region4: #{tpu_custom_call.1} parent=1 // pred_region
      %s17 = sadd.s32 0, 0
      %s19 = ssub.s32 128, 128
      %20 = vsyncadd [#allocation3], %s19
      %s21 = smul.addr %s17, 128
      %s22 = scalar_lea.hbm %s0, %s21
      %s24 = sshll.u32 [#allocation2], 4
      %s25 = int_to_ptr.vmem [resolvable:$true] %s24
      %27 = dma.hbm_to_vmem [thread:$0]  %s22, 128, %s25, [#allocation3]
    $region5: #{tpu_custom_call.1} parent=1 // pred_fallthru
      _
    // Predicated region
    $region6: #{tpu_custom_call.1} parent=1 // pred_check
      _
    $region7: #{tpu_custom_call.1} parent=1 // pred_check_branch
      %29 = sbr.rel (0) target = $region9
    $region8: #{tpu_custom_call.1} parent=1 // pred_region
      %s30 = sadd.s32 0, 0
      %s32 = ssub.s32 128, 128
      %33 = vsyncadd [#allocation6], %s32
      %s34 = smul.addr %s30, 128
      %s35 = scalar_lea.hbm %s1, %s34
      %s37 = sshll.u32 [#allocation5], 4
      %s38 = int_to_ptr.vmem [resolvable:$true] %s37
      %40 = dma.hbm_to_vmem [thread:$0]  %s35, 128, %s38, [#allocation6]
    $region9: #{tpu_custom_call.1} parent=1 // pred_fallthru
      _
    // Predicated region
    $region10: #{tpu_custom_call.1} parent=1 // pred_check
      _
    $region11: #{tpu_custom_call.1} parent=1 // pred_check_branch
      %42 = sbr.rel (0) target = $region13
    $region12: #{tpu_custom_call.1} parent=1 // pred_region
      %s43 = sadd.s32 0, 0
      %s45 = ssub.s32 128, 128
      %46 = vsyncadd [#allocation6], %s45
      %s47 = smul.addr %s43, 128
      %s48 = scalar_lea.hbm %s2, %s47
      %s50 = sshll.u32 [#allocation7], 4
      %s51 = int_to_ptr.vmem [resolvable:$true] %s50
      %53 = dma.hbm_to_vmem [thread:$0]  %s48, 128, %s51, [#allocation6]
    $region13: #{tpu_custom_call.1} parent=1 // pred_fallthru
      _
    // Predicated region
    $region14: #{tpu_custom_call.1} parent=1 // pred_check
      _
    $region15: #{tpu_custom_call.1} parent=1 // pred_check_branch
      %55 = sbr.rel (0) target = $region17
    $region16: #{tpu_custom_call.1} parent=1 // pred_region
      %56 = dma.done [#allocation3], 128
    $region17: #{tpu_custom_call.1} parent=1 // pred_fallthru
      _
    // Predicated region
    $region18: #{tpu_custom_call.1} parent=1 // pred_check
      _
    $region19: #{tpu_custom_call.1} parent=1 // pred_check_branch
      %58 = sbr.rel (0) target = $region21
    $region20: #{tpu_custom_call.1} parent=1 // pred_region
      %59 = dma.done [#allocation6], 128
    $region21: #{tpu_custom_call.1} parent=1 // pred_fallthru
      _
    // Predicated region
    $region22: #{tpu_custom_call.1} parent=1 // pred_check
      _
    $region23: #{tpu_custom_call.1} parent=1 // pred_check_branch
      %61 = sbr.rel (0) target = $region25
    $region24: #{tpu_custom_call.1} parent=1 // pred_region
      %62 = dma.done [#allocation6], 128
    $region25: #{tpu_custom_call.1} parent=1 // pred_fallthru
      _
    %s63 = sadd.s32 0, 0
    %s64 = sadd.s32 0, 0
    %s65 = sadd.s32 0, 0
    %p66 = scmp.eq.s32.totalorder 0, 0
    // Predicated region
    $region26: #{tpu_custom_call.1} parent=1 // pred_check
      %p67 = pneg %p66
    $region27: #{tpu_custom_call.1} parent=1 // pred_check_branch
      %69 = sbr.rel (%p67) target = $region29
    $region28: #{tpu_custom_call.1} parent=1 // pred_region
      %vm70 = vcmask 0
      %71 = vst.msk [vmem:[#allocation8] sm:$0x1] %vm70, 0.0
      %72 = vst.msk [vmem:[#allocation9] sm:$0x1] %vm70, 0.0
      %73 = vst.msk [vmem:[#allocation11] sm:$0x1] %vm70, 0.0
    $region29: #{tpu_custom_call.1} parent=1 // pred_fallthru
      _
    %v74 = vld [vmem:[#allocation2] sm:$0xff]
    %v75 = vld [vmem:[#allocation5] sm:$0xff]
    %v76 = vsub.f32 %v74, %v75
    %v77 = vadd.f32 %v76, 1e-06
    %v78 = vmul.f32 %v77, %v77
    %vm79 = vcmask 261120
    %v80 = vsel %vm79, %v78, 0.0
    %81 = vadd.xlane.f32.xlu0 %v80
    %v82 = vpop.xlane.xlu0 %81
    %v83 = vrsqrt.pop %v82
    %v84 = vmul.f32 %v82, %v83
    %vm85 = vcmp.eq.f32.partialorder %v82, inf
    %v86 = vsel %vm85, %v82, %v84
    %vm87 = vcmp.eq.f32.partialorder %v82, 0.0
    %v88 = vand.u32 %v82, 2147483648
    %v89 = vsel %vm87, %v88, %v86
    %v90 = vld [vmem:[#allocation7] sm:$0xff]
    %v91 = vsub.f32 %v74, %v90
    %v92 = vadd.f32 %v91, 1e-06
    %v93 = vmul.f32 %v92, %v92
    %v94 = vsel %vm79, %v93, 0.0
    %95 = vadd.xlane.f32.xlu0 %v94
    %v96 = vpop.xlane.xlu0 %95
    %v97 = vrsqrt.pop %v96
    %v98 = vmul.f32 %v96, %v97
    %vm99 = vcmp.eq.f32.partialorder %v96, inf
    %v100 = vsel %vm99, %v96, %v98
    %vm101 = vcmp.eq.f32.partialorder %v96, 0.0
    %v102 = vand.u32 %v96, 2147483648
    %v103 = vsel %vm101, %v102, %v100
    %v104 = vsub.f32 %v89, %v103
    %v105 = vadd.f32 %v104, 0.5
    %v106 = vmax.f32 %v105, 0.0
    %v107 = vld [vmem:[#allocation8] sm:$0x1]
    %vm108 = vcmask 7168
    %v109 = vsel %vm108, %v106, 0.0
    %110 = vadd.xlane.f32.xlu0 %v109
    %v111 = vpop.xlane.xlu0 %110
    %v112 = vrot.slane %v111, 4
    %v113 = vadd.f32 %v111, %v112
    %v114 = vrot.slane %v113, 2
    %v115 = vadd.f32 %v113, %v114
    %v116 = vrot.slane %v115, 1
    %v117 = vadd.f32 %v115, %v116
    %s118 = vtos %v117
    %v119 = vstv %s118
    %v120 = vadd.f32 %v107, %v119
    %vm121 = vcmask 0
    %122 = vst.msk [vmem:[#allocation8] sm:$0x1] %vm121, %v120
    %v123 = vld [vmem:[#allocation9] sm:$0x1]
    %v124 = vsel %vm108, %v89, 0.0
    %125 = vadd.xlane.f32.xlu0 %v124
    %v126 = vpop.xlane.xlu0 %125
    %v127 = vrot.slane %v126, 4
    %v128 = vadd.f32 %v126, %v127
    %v129 = vrot.slane %v128, 2
    %v130 = vadd.f32 %v128, %v129
    %v131 = vrot.slane %v130, 1
    %v132 = vadd.f32 %v130, %v131
    %s133 = vtos %v132
    %v134 = vstv %s133
    %v135 = vadd.f32 %v123, %v134
    %136 = vst.msk [vmem:[#allocation9] sm:$0x1] %vm121, %v135
    %v137 = vld [vmem:[#allocation11] sm:$0x1]
    %v138 = vsel %vm108, %v103, 0.0
    %139 = vadd.xlane.f32.xlu0 %v138
    %v140 = vpop.xlane.xlu0 %139
    %v141 = vrot.slane %v140, 4
    %v142 = vadd.f32 %v140, %v141
    %v143 = vrot.slane %v142, 2
    %v144 = vadd.f32 %v142, %v143
    %v145 = vrot.slane %v144, 1
    %v146 = vadd.f32 %v144, %v145
    %s147 = vtos %v146
    %v148 = vstv %s147
    %v149 = vadd.f32 %v137, %v148
    %150 = vst.msk [vmem:[#allocation11] sm:$0x1] %vm121, %v149
    // Predicated region
    $region30: #{tpu_custom_call.1} parent=1 // pred_check
      _
    $region31: #{tpu_custom_call.1} parent=1 // pred_check_branch
      %152 = sbr.rel (0) target = $region33
    $region32: #{tpu_custom_call.1} parent=1 // pred_region
      %s154 = ssub.s32 16, 16
      %155 = vsyncadd [#allocation4], %s154
      %s157 = sshll.u32 [#allocation8], 4
      %s158 = int_to_ptr.vmem [resolvable:$true] %s157
      %160 = dma.vmem_to_hbm [thread:$0]  %s158, 16, %s3, [#allocation4]
    $region33: #{tpu_custom_call.1} parent=1 // pred_fallthru
      _
    // Predicated region
    $region34: #{tpu_custom_call.1} parent=1 // pred_check
      _
    $region35: #{tpu_custom_call.1} parent=1 // pred_check_branch
      %162 = sbr.rel (0) target = $region37
    $region36: #{tpu_custom_call.1} parent=1 // pred_region
      %s164 = ssub.s32 16, 16
      %165 = vsyncadd [#allocation10], %s164
      %s167 = sshll.u32 [#allocation9], 4
      %s168 = int_to_ptr.vmem [resolvable:$true] %s167
      %170 = dma.vmem_to_hbm [thread:$0]  %s168, 16, %s4, [#allocation10]
    $region37: #{tpu_custom_call.1} parent=1 // pred_fallthru
      _
    // Predicated region
    $region38: #{tpu_custom_call.1} parent=1 // pred_check
      _
    $region39: #{tpu_custom_call.1} parent=1 // pred_check_branch
      %172 = sbr.rel (0) target = $region41
    $region40: #{tpu_custom_call.1} parent=1 // pred_region
      %s174 = ssub.s32 16, 16
      %175 = vsyncadd [#allocation10], %s174
      %s177 = sshll.u32 [#allocation11], 4
      %s178 = int_to_ptr.vmem [resolvable:$true] %s177
      %180 = dma.vmem_to_hbm [thread:$0]  %s178, 16, %s5, [#allocation10]
    $region41: #{tpu_custom_call.1} parent=1 // pred_fallthru
      _
    // Predicated region
    $region42: #{tpu_custom_call.1} parent=1 // pred_check
      _
    $region43: #{tpu_custom_call.1} parent=1 // pred_check_branch
      %182 = sbr.rel (0) target = $region45
    $region44: #{tpu_custom_call.1} parent=1 // pred_region
      %183 = dma.done [#allocation4], 16
    $region45: #{tpu_custom_call.1} parent=1 // pred_fallthru
      _
    // Predicated region
    $region46: #{tpu_custom_call.1} parent=1 // pred_check
      _
    $region47: #{tpu_custom_call.1} parent=1 // pred_check_branch
      %185 = sbr.rel (0) target = $region49
    $region48: #{tpu_custom_call.1} parent=1 // pred_region
      %186 = dma.done [#allocation10], 16
    $region49: #{tpu_custom_call.1} parent=1 // pred_fallthru
      _
    // Predicated region
    $region50: #{tpu_custom_call.1} parent=1 // pred_check
      _
    $region51: #{tpu_custom_call.1} parent=1 // pred_check_branch
      %188 = sbr.rel (0) target = $region53
    $region52: #{tpu_custom_call.1} parent=1 // pred_region
      %189 = dma.done [#allocation10], 16
    $region53: #{tpu_custom_call.1} parent=1 // pred_fallthru
      _
    %190 = vsyncpa [#allocation3], 1
    %191 = vsyncpa [#allocation6], 1
    %192 = vsyncpa [#allocation4], 1
    %193 = vsyncpa [#allocation10], 1

</llo_original>
